<compile_context>
chip_gen: v7x
topology: tpu7x:2x2x1
jax: 0.10.0
libtpu: 0.0.40
codegen_flags: <defaults>
</compile_context>

<pallas_src>
import functools
import math

import jax
import jax.numpy as jnp
import numpy as np
from jax.experimental import pallas as pl
from jax.experimental.pallas import tpu as pltpu

_MAX_BB = 8          # cap on per-grid-step batch block (unroll / VMEM bound)
_SPLIT_FLOPS = 2e6   # min useful per-step FLOPs before sharding across TCs


def _keypointnet_kernel(x_ref, w1_ref, b1_ref, w2_ref, b2_ref,
                        pool_ref, lin_ref, neg_ref, rep_ref,
                        mu_ref, heat_ref, *, inv_std2, bb, hw):
    """One grid step == `bb` batch elements, shared (non-block-diag) weights.

    x_ref    : [bb, C, HW]   activations, HW lane-dense
    w1_ref   : [hid, C]      encoder 1x1-conv weight   (shared)
    b1_ref   : [hid, 1]      encoder bias
    w2_ref   : [K, hid]      keypoint 1x1-conv weight  (shared)
    b2_ref   : [K, 1]        keypoint bias
    pool_ref : [HW, Hp]      mean-over-W matrix, zero-padded to Hp (128k) lanes
    lin_ref  : [1, Hp]       linspace(-1, 1, H), zero pad
    neg_ref  : [1, Hp]       0 on valid columns, -1e30 on pad (softmax mask)
    rep_ref  : [Hp, 2*HW]    fused replication matrix [rep_y | rep_x]
    mu_ref   : [bb, K, Hp]   lane-dense (padded) keypoint coordinates
    heat_ref : [bb, K, HW]   lane-dense heatmap slab
    """
    # Hoist all grid-constant loads out of the per-element loop.
    w1 = w1_ref[...]
    b1 = b1_ref[...]
    w2 = w2_ref[...]
    b2 = b2_ref[...]
    pool = pool_ref[...]
    lin = lin_ref[...]
    neg = neg_ref[...]
    rep = rep_ref[...]

    for b in range(bb):                      # static unroll, bb <= _MAX_BB
        x = x_ref[b]                                                 # [C, HW]

        # Encoder 1x1 conv + bias + ReLU.
        feat = jnp.dot(w1, x, preferred_element_type=jnp.float32) + b1
        feat = jnp.maximum(feat, 0.0)                                # [hid, HW]

        # Keypoint 1x1 conv + bias.
        kp = jnp.dot(w2, feat.astype(w2.dtype),
                     preferred_element_type=jnp.float32) + b2        # [K, HW]

        # mean over W (matmul with padded pool) -> [K, Hp]; pad columns get
        # -1e30 so they vanish from the softmax.
        gc = jnp.dot(kp, pool, preferred_element_type=jnp.float32) + neg

        # softmax over H (stable; pad columns underflow to exactly 0).
        m = jnp.max(gc, axis=-1, keepdims=True)
        e = jnp.exp(gc - m)
        # Exact divide on purpose: with gauss_std=0.1 the heatmap amplifies mu
        # error ~20x, so an approx pl.reciprocal risks the 1e-3 tolerance.
        p = e / jnp.sum(e, axis=-1, keepdims=True)                   # [K, Hp]

        mu = p * lin                                                 # [K, Hp]
        mu_ref[b] = mu                       # full-width (128-lane) store

        # Factored gaussian: heat[k, h*W + w] = g[k, h] * g[k, w].
        # Pad columns of g are exp(0)=1, but rep's pad rows are all-zero.
        g = jnp.exp(-((lin - mu) ** 2) * inv_std2)                   # [K, Hp]
        gg = jnp.dot(g, rep, preferred_element_type=jnp.float32)     # [K, 2*HW]
        heat_ref[b] = gg[:, :hw] * gg[:, hw:]                        # [K, HW]


def _num_tensorcores():
    """TensorCores per chip: 2 on v7x, 1 on v5e/v6e.  Best-effort query."""
    try:
        info = pltpu.get_tpu_info()
        for attr in ("num_cores", "core_count", "num_tensor_cores",
                     "tensorcores_per_chip"):
            n = getattr(info, attr, None)
            if isinstance(n, int) and n > 0:
                return max(1, min(n, 2))
        ver = getattr(info, "chip_version", None)
        if ver is not None and "7" in str(ver).lower():
            return 2
    except Exception:
        pass
    try:
        if "v7" in jax.devices()[0].device_kind.lower():
            return 2
    except Exception:
        pass
    return 1


def _pick_grid(batch, flops_per_elem):
    """Grid policy.

    One grid step unless (a) a multi-TC chip (v7x) can be fed enough work per
    step to amortize the ~0.35-1us fixed per-step cost, or (b) the per-step
    batch block would exceed _MAX_BB (code-size / VMEM cap; all per-step state
    is O(bb), so this is a soft cap, not a kron-style quadratic blow-up).
    """
    num_tc = _num_tensorcores()
    nblk = 1
    if (num_tc > 1 and batch % num_tc == 0
            and flops_per_elem * (batch // num_tc) >= _SPLIT_FLOPS):
        nblk = num_tc
    while batch // nblk > _MAX_BB and batch % (nblk * 2) == 0:
        nblk *= 2
    return nblk, batch // nblk


def prepare_keypointnet(params, height, width, *, matmul_dtype=jnp.float32):
    """Builds every forward-time constant ONCE (call at param-init time).

    Keeping this out of keypointnet_forward means the per-call graph is just
    the Pallas kernel plus trivial output slice/reshape/stack ops.
    """
    assert height == width, (
        "reference KeyPointNet semantics require square feature maps")
    hid, c_in = params["w_enc"].shape
    num_kp = params["w_kp"].shape[0]
    hw = height * width
    hp = pl.cdiv(height, 128) * 128          # lane-padded coordinate width

    pool = np.zeros((hw, hp), np.float32)    # mean over W: pool[h*W+w, h]=1/W
    lin = np.zeros((1, hp), np.float32)
    neg = np.zeros((1, hp), np.float32)
    rep = np.zeros((hp, 2 * hw), np.float32)  # fused [rep_y | rep_x]
    lin[0, :height] = np.linspace(-1.0, 1.0, height, dtype=np.float32)
    neg[0, height:] = -1e30
    for h in range(height):
        pool[h * width:(h + 1) * width, h] = 1.0 / width
        rep[h, h * width:(h + 1) * width] = 1.0          # g broadcast over w
    for w in range(width):
        rep[w, hw + w::width] = 1.0                      # g broadcast over h

    return {
        "w1": jnp.asarray(params["w_enc"], matmul_dtype),
        "b1": jnp.asarray(params["b_enc"], jnp.float32),
        "w2": jnp.asarray(params["w_kp"], matmul_dtype),
        "b2": jnp.asarray(params["b_kp"], jnp.float32),
        "pool": jnp.asarray(pool),
        "lin": jnp.asarray(lin),
        "neg": jnp.asarray(neg),
        "rep": jnp.asarray(rep),
        "meta": dict(c=c_in, hid=hid, k=num_kp, h=height, w=width,
                     hp=hp, hw=hw, matmul_dtype=matmul_dtype),
    }


def keypointnet_forward(x_nchw, prepared, gauss_std):
    meta = prepared["meta"]
    B, C, H, W = x_nchw.shape
    assert (C, H, W) == (meta["c"], meta["h"], meta["w"])
    K, hid, HW, Hp = meta["k"], meta["hid"], meta["hw"], meta["hp"]

    # Useful (unpadded) FLOPs per batch element: two 1x1 convs + pool + rep.
    flops_per_elem = (2 * HW * (C * hid + hid * K)
                      + 2 * K * HW * H + 4 * K * H * HW)
    nblk, bb = _pick_grid(B, flops_per_elem)

    x = x_nchw.reshape(B, C, HW).astype(meta["matmul_dtype"])

    kernel = functools.partial(_keypointnet_kernel,
                               inv_std2=(1.0 / gauss_std) ** 2, bb=bb, hw=HW)

    const_names = ("w1", "b1", "w2", "b2", "pool", "lin", "neg", "rep")
    consts = [prepared[n] for n in const_names]

    cost = pl.CostEstimate(
        flops=int(B * (2 * HW * (C * hid + hid * K)
                       + 2 * K * HW * Hp + 4 * K * Hp * HW)),
        transcendentals=int(2 * B * K * Hp),
        bytes_accessed=int(x.size * x.dtype.itemsize
                           + sum(c.size * c.dtype.itemsize for c in consts)
                           + 4 * B * K * (Hp + HW)),
    )

    mu_pad, heat = pl.pallas_call(
        kernel,
        out_shape=(jax.ShapeDtypeStruct((B, K, Hp), jnp.float32),
                   jax.ShapeDtypeStruct((B, K, HW), jnp.float32)),
        grid_spec=pltpu.PrefetchScalarGridSpec(
            num_scalar_prefetch=0,
            grid=(nblk,),
            in_specs=[pl.BlockSpec((bb, C, HW), lambda i: (i, 0, 0))]
                    + [pl.BlockSpec(c.shape, lambda i: (0, 0)) for c in consts],
            out_specs=[pl.BlockSpec((bb, K, Hp), lambda i: (i, 0, 0)),
                       pl.BlockSpec((bb, K, HW), lambda i: (i, 0, 0))],
        ),
        compiler_params=pltpu.CompilerParams(
            dimension_semantics=("parallel",)),
        cost_estimate=cost,
    )(x, *consts)

    # Cheap wrapper-side layout plumbing (pure XLA slice / reshape / stack).
    mu = mu_pad[:, :, :H]                                            # [B, K, H]
    centers = jnp.stack([mu, mu], axis=-1)                           # [B, K, H, 2]
    heatmaps = heat.reshape(B, K, H, W)                              # [B, K, H, W]
    return {"centers": centers, "heatmaps": heatmaps}


def reference_forward(x_nchw, params, gauss_std):
    """Pure-JAX reference mirroring the PyTorch code exactly."""
    B, C, H, W = x_nchw.shape
    feat = jnp.einsum("oc,bchw->bohw", params["w_enc"], x_nchw) \
        + params["b_enc"].reshape(1, -1, 1, 1)
    feat = jnp.maximum(feat, 0.0)
    kp = jnp.einsum("ko,bohw->bkhw", params["w_kp"], feat) \
        + params["b_kp"].reshape(1, -1, 1, 1)                        # [B,K,H,W]
    gc = kp.mean(axis=3)                                             # [B,K,H]
    p = jax.nn.softmax(gc, axis=-1)
    lin = jnp.linspace(-1.0, 1.0, H)
    mu = p * lin[None, None, :]                                      # [B,K,H]
    centers = jnp.stack([mu, mu], axis=-1)                           # [B,K,H,2]
    inv_std = 1.0 / gauss_std
    g_y = (lin[None, None, :, None] - mu[:, :, :, None]) ** 2        # [B,K,H,1]
    g_x = (lin[None, None, None, :] - mu[:, :, None, :]) ** 2        # [B,K,1,W]
    heat = jnp.exp(-(g_y + g_x) * (inv_std ** 2))                    # [B,K,H,W]
    return {"centers": centers, "heatmaps": heat}


def init_params(key, c_in, num_keypoints, hidden=32):
    """Deterministic synthetic parameters (PyTorch-like uniform init)."""
    # TODO(synk): the real `keypoint_encoder` is an arbitrary external module;
    # it is modeled here as a single 1x1 conv (c_in -> 32) + ReLU.
    k1, k2, k3, k4 = jax.random.split(key, 4)
    s_enc = 1.0 / math.sqrt(c_in)
    s_kp = 1.0 / math.sqrt(hidden)
    return {
        "w_enc": jax.random.uniform(k1, (hidden, c_in), jnp.float32, -s_enc, s_enc),
        "b_enc": jax.random.uniform(k2, (hidden, 1), jnp.float32, -s_enc, s_enc),
        "w_kp": jax.random.uniform(k3, (num_keypoints, hidden), jnp.float32, -s_kp, s_kp),
        "b_kp": jax.random.uniform(k4, (num_keypoints, 1), jnp.float32, -s_kp, s_kp),
    }


if __name__ == "__main__":
    B, C_in, H, W = 2, 4, 16, 16
    K = 8
    gauss_std = 0.1

    key = jax.random.PRNGKey(0)
    k_x, k_p = jax.random.split(key)
    x = jax.random.normal(k_x, (B, C_in, H, W), dtype=jnp.float32)
    params = init_params(k_p, C_in, K)

    # Constants / weight casts built once at init time (not per forward call).
    prepared = prepare_keypointnet(params, H, W)

    out = keypointnet_forward(x, prepared, gauss_std)
    jax.block_until_ready(out)

    ref = reference_forward(x, params, gauss_std)
    np.testing.assert_allclose(np.asarray(out["centers"]),
                               np.asarray(ref["centers"]),
                               rtol=1e-3, atol=1e-3)
    np.testing.assert_allclose(np.asarray(out["heatmaps"]),
                               np.asarray(ref["heatmaps"]),
                               rtol=1e-3, atol=1e-3)

    print("KERNEL_OK")
</pallas_src>

<mosaic_0001>
module attributes {stable_mosaic.version = 11 : i64} {
  func.func @_keypointnet_kernel(%arg0: i32, %arg1: memref<2x4x256xf32, #tpu.memory_space<vmem>>, %arg2: memref<32x4xf32, #tpu.memory_space<vmem>>, %arg3: memref<32x1xf32, #tpu.memory_space<vmem>>, %arg4: memref<8x32xf32, #tpu.memory_space<vmem>>, %arg5: memref<8x1xf32, #tpu.memory_space<vmem>>, %arg6: memref<256x128xf32, #tpu.memory_space<vmem>>, %arg7: memref<1x128xf32, #tpu.memory_space<vmem>>, %arg8: memref<1x128xf32, #tpu.memory_space<vmem>>, %arg9: memref<128x512xf32, #tpu.memory_space<vmem>>, %arg10: memref<2x8x128xf32, #tpu.memory_space<vmem>>, %arg11: memref<2x8x256xf32, #tpu.memory_space<vmem>>) attributes {dimension_semantics = [#tpu.dimension_semantics<parallel>], iteration_bounds = array<i64: 1>, scalar_prefetch = 0 : i64, scratch_operands = 0 : i64, tpu.core_type = #tpu.core_type<tc>, window_params = [{transform_indices = @transform_0, window_bounds = array<i64: 2, 4, 256>}, {pipeline_mode = #tpu.pipeline_mode<synchronous>, transform_indices = @transform_1, window_bounds = array<i64: 32, 4>}, {pipeline_mode = #tpu.pipeline_mode<synchronous>, transform_indices = @transform_2, window_bounds = array<i64: 32, 1>}, {pipeline_mode = #tpu.pipeline_mode<synchronous>, transform_indices = @transform_3, window_bounds = array<i64: 8, 32>}, {pipeline_mode = #tpu.pipeline_mode<synchronous>, transform_indices = @transform_4, window_bounds = array<i64: 8, 1>}, {pipeline_mode = #tpu.pipeline_mode<synchronous>, transform_indices = @transform_5, window_bounds = array<i64: 256, 128>}, {pipeline_mode = #tpu.pipeline_mode<synchronous>, transform_indices = @transform_6, window_bounds = array<i64: 1, 128>}, {pipeline_mode = #tpu.pipeline_mode<synchronous>, transform_indices = @transform_7, window_bounds = array<i64: 1, 128>}, {pipeline_mode = #tpu.pipeline_mode<synchronous>, transform_indices = @transform_8, window_bounds = array<i64: 128, 512>}, {transform_indices = @transform_9, window_bounds = array<i64: 2, 8, 128>}, {transform_indices = @transform_10, window_bounds = array<i64: 2, 8, 256>}]} {
    %c0 = arith.constant 0 : index
    %c0_0 = arith.constant 0 : index
    %0 = vector.load %arg2[%c0, %c0_0] : memref<32x4xf32, #tpu.memory_space<vmem>>, vector<32x4xf32>
    %c0_1 = arith.constant 0 : index
    %c0_2 = arith.constant 0 : index
    %1 = vector.load %arg3[%c0_1, %c0_2] : memref<32x1xf32, #tpu.memory_space<vmem>>, vector<32x1xf32>
    %c0_3 = arith.constant 0 : index
    %c0_4 = arith.constant 0 : index
    %2 = vector.load %arg4[%c0_3, %c0_4] : memref<8x32xf32, #tpu.memory_space<vmem>>, vector<8x32xf32>
    %c0_5 = arith.constant 0 : index
    %c0_6 = arith.constant 0 : index
    %3 = vector.load %arg5[%c0_5, %c0_6] : memref<8x1xf32, #tpu.memory_space<vmem>>, vector<8x1xf32>
    %c0_7 = arith.constant 0 : index
    %c0_8 = arith.constant 0 : index
    %4 = vector.load %arg6[%c0_7, %c0_8] : memref<256x128xf32, #tpu.memory_space<vmem>>, vector<256x128xf32>
    %c0_9 = arith.constant 0 : index
    %c0_10 = arith.constant 0 : index
    %5 = vector.load %arg7[%c0_9, %c0_10] : memref<1x128xf32, #tpu.memory_space<vmem>>, vector<1x128xf32>
    %c0_11 = arith.constant 0 : index
    %c0_12 = arith.constant 0 : index
    %6 = vector.load %arg8[%c0_11, %c0_12] : memref<1x128xf32, #tpu.memory_space<vmem>>, vector<1x128xf32>
    %c0_13 = arith.constant 0 : index
    %c0_14 = arith.constant 0 : index
    %7 = vector.load %arg9[%c0_13, %c0_14] : memref<128x512xf32, #tpu.memory_space<vmem>>, vector<128x512xf32>
    %c0_15 = arith.constant 0 : index
    %c0_16 = arith.constant 0 : index
    %c0_17 = arith.constant 0 : index
    %8 = vector.load %arg1[%c0_15, %c0_16, %c0_17] : memref<2x4x256xf32, #tpu.memory_space<vmem>>, vector<1x4x256xf32>
    %9 = vector.shape_cast %8 : vector<1x4x256xf32> to vector<4x256xf32>
    %cst = arith.constant dense<0.000000e+00> : vector<32x256xf32>
    %10 = tpu.matmul %0, %9, %cst {dimension_numbers = #tpu.dot_dimension_numbers<[1], [0], [0], [1], [0, 0, 1, 1], [], []>} : vector<32x4xf32>, vector<4x256xf32>, vector<32x256xf32> -> vector<32x256xf32>
    %11 = vector.broadcast %1 : vector<32x1xf32> to vector<32x256xf32>
    %12 = arith.addf %10, %11 : vector<32x256xf32>
    %cst_18 = arith.constant 0.000000e+00 : f32
    %13 = vector.broadcast %cst_18 : f32 to vector<32x256xf32>
    %14 = arith.maximumf %12, %13 : vector<32x256xf32>
    %cst_19 = arith.constant dense<0.000000e+00> : vector<8x256xf32>
    %15 = tpu.matmul %2, %14, %cst_19 {dimension_numbers = #tpu.dot_dimension_numbers<[1], [0], [0], [1], [0, 0, 1, 1], [], []>} : vector<8x32xf32>, vector<32x256xf32>, vector<8x256xf32> -> vector<8x256xf32>
    %16 = vector.broadcast %3 : vector<8x1xf32> to vector<8x256xf32>
    %17 = arith.addf %15, %16 : vector<8x256xf32>
    %cst_20 = arith.constant dense<0.000000e+00> : vector<8x128xf32>
    %18 = tpu.matmul %17, %4, %cst_20 {dimension_numbers = #tpu.dot_dimension_numbers<[1], [0], [0], [1], [0, 0, 1, 1], [], []>} : vector<8x256xf32>, vector<256x128xf32>, vector<8x128xf32> -> vector<8x128xf32>
    %19 = vector.broadcast %6 : vector<1x128xf32> to vector<8x128xf32>
    %20 = arith.addf %18, %19 : vector<8x128xf32>
    %cst_21 = arith.constant dense<0xFF800000> : vector<8xf32>
    %21 = vector.multi_reduction <maximumf>, %20, %cst_21 [1] : vector<8x128xf32> to vector<8xf32>
    %22 = vector.shape_cast %21 : vector<8xf32> to vector<8x1xf32>
    %23 = vector.broadcast %22 : vector<8x1xf32> to vector<8x128xf32>
    %24 = arith.subf %20, %23 : vector<8x128xf32>
    %25 = math.exp %24 : vector<8x128xf32>
    %cst_22 = arith.constant dense<0.000000e+00> : vector<8xf32>
    %26 = vector.multi_reduction <add>, %25, %cst_22 [1] : vector<8x128xf32> to vector<8xf32>
    %27 = vector.shape_cast %26 : vector<8xf32> to vector<8x1xf32>
    %28 = vector.broadcast %27 : vector<8x1xf32> to vector<8x128xf32>
    %29 = arith.divf %25, %28 : vector<8x128xf32>
    %30 = vector.broadcast %5 : vector<1x128xf32> to vector<8x128xf32>
    %31 = arith.mulf %29, %30 : vector<8x128xf32>
    %c0_23 = arith.constant 0 : index
    %c0_24 = arith.constant 0 : index
    %c0_25 = arith.constant 0 : index
    %32 = vector.load %arg10[%c0_23, %c0_24, %c0_25] : memref<2x8x128xf32, #tpu.memory_space<vmem>>, vector<1x8x128xf32>
    %33 = vector.shape_cast %32 : vector<1x8x128xf32> to vector<8x128xf32>
    %34 = vector.shape_cast %31 : vector<8x128xf32> to vector<1x8x128xf32>
    tpu.vector_store %arg10[%c0_23, %c0_24, %c0_25], %34 {strides = array<i32>} : memref<2x8x128xf32, #tpu.memory_space<vmem>>, vector<1x8x128xf32>,
    %35 = vector.broadcast %5 : vector<1x128xf32> to vector<8x128xf32>
    %36 = arith.subf %35, %31 : vector<8x128xf32>
    %37 = arith.mulf %36, %36 : vector<8x128xf32>
    %cst_26 = arith.constant 0.000000e+00 : f32
    %38 = vector.broadcast %cst_26 : f32 to vector<8x128xf32>
    %39 = arith.subf %38, %37 : vector<8x128xf32>
    %cst_27 = arith.constant 1.000000e+02 : f32
    %40 = vector.broadcast %cst_27 : f32 to vector<8x128xf32>
    %41 = arith.mulf %39, %40 : vector<8x128xf32>
    %42 = math.exp %41 : vector<8x128xf32>
    %cst_28 = arith.constant dense<0.000000e+00> : vector<8x512xf32>
    %43 = tpu.matmul %42, %7, %cst_28 {dimension_numbers = #tpu.dot_dimension_numbers<[1], [0], [0], [1], [0, 0, 1, 1], [], []>} : vector<8x128xf32>, vector<128x512xf32>, vector<8x512xf32> -> vector<8x512xf32>
    %44 = vector.extract_strided_slice %43 {offsets = [0, 0], sizes = [8, 256], strides = [1, 1]} : vector<8x512xf32> to vector<8x256xf32>
    %45 = vector.extract_strided_slice %43 {offsets = [0, 256], sizes = [8, 256], strides = [1, 1]} : vector<8x512xf32> to vector<8x256xf32>
    %46 = arith.mulf %44, %45 : vector<8x256xf32>
    %c0_29 = arith.constant 0 : index
    %c0_30 = arith.constant 0 : index
    %c0_31 = arith.constant 0 : index
    %47 = vector.load %arg11[%c0_29, %c0_30, %c0_31] : memref<2x8x256xf32, #tpu.memory_space<vmem>>, vector<1x8x256xf32>
    %48 = vector.shape_cast %47 : vector<1x8x256xf32> to vector<8x256xf32>
    %49 = vector.shape_cast %46 : vector<8x256xf32> to vector<1x8x256xf32>
    tpu.vector_store %arg11[%c0_29, %c0_30, %c0_31], %49 {strides = array<i32>} : memref<2x8x256xf32, #tpu.memory_space<vmem>>, vector<1x8x256xf32>,
    %c1 = arith.constant 1 : index
    %c0_32 = arith.constant 0 : index
    %c0_33 = arith.constant 0 : index
    %50 = vector.load %arg1[%c1, %c0_32, %c0_33] : memref<2x4x256xf32, #tpu.memory_space<vmem>>, vector<1x4x256xf32>
    %51 = vector.shape_cast %50 : vector<1x4x256xf32> to vector<4x256xf32>
    %cst_34 = arith.constant dense<0.000000e+00> : vector<32x256xf32>
    %52 = tpu.matmul %0, %51, %cst_34 {dimension_numbers = #tpu.dot_dimension_numbers<[1], [0], [0], [1], [0, 0, 1, 1], [], []>} : vector<32x4xf32>, vector<4x256xf32>, vector<32x256xf32> -> vector<32x256xf32>
    %53 = vector.broadcast %1 : vector<32x1xf32> to vector<32x256xf32>
    %54 = arith.addf %52, %53 : vector<32x256xf32>
    %cst_35 = arith.constant 0.000000e+00 : f32
    %55 = vector.broadcast %cst_35 : f32 to vector<32x256xf32>
    %56 = arith.maximumf %54, %55 : vector<32x256xf32>
    %cst_36 = arith.constant dense<0.000000e+00> : vector<8x256xf32>
    %57 = tpu.matmul %2, %56, %cst_36 {dimension_numbers = #tpu.dot_dimension_numbers<[1], [0], [0], [1], [0, 0, 1, 1], [], []>} : vector<8x32xf32>, vector<32x256xf32>, vector<8x256xf32> -> vector<8x256xf32>
    %58 = vector.broadcast %3 : vector<8x1xf32> to vector<8x256xf32>
    %59 = arith.addf %57, %58 : vector<8x256xf32>
    %cst_37 = arith.constant dense<0.000000e+00> : vector<8x128xf32>
    %60 = tpu.matmul %59, %4, %cst_37 {dimension_numbers = #tpu.dot_dimension_numbers<[1], [0], [0], [1], [0, 0, 1, 1], [], []>} : vector<8x256xf32>, vector<256x128xf32>, vector<8x128xf32> -> vector<8x128xf32>
    %61 = vector.broadcast %6 : vector<1x128xf32> to vector<8x128xf32>
    %62 = arith.addf %60, %61 : vector<8x128xf32>
    %cst_38 = arith.constant dense<0xFF800000> : vector<8xf32>
    %63 = vector.multi_reduction <maximumf>, %62, %cst_38 [1] : vector<8x128xf32> to vector<8xf32>
    %64 = vector.shape_cast %63 : vector<8xf32> to vector<8x1xf32>
    %65 = vector.broadcast %64 : vector<8x1xf32> to vector<8x128xf32>
    %66 = arith.subf %62, %65 : vector<8x128xf32>
    %67 = math.exp %66 : vector<8x128xf32>
    %cst_39 = arith.constant dense<0.000000e+00> : vector<8xf32>
    %68 = vector.multi_reduction <add>, %67, %cst_39 [1] : vector<8x128xf32> to vector<8xf32>
    %69 = vector.shape_cast %68 : vector<8xf32> to vector<8x1xf32>
    %70 = vector.broadcast %69 : vector<8x1xf32> to vector<8x128xf32>
    %71 = arith.divf %67, %70 : vector<8x128xf32>
    %72 = vector.broadcast %5 : vector<1x128xf32> to vector<8x128xf32>
    %73 = arith.mulf %71, %72 : vector<8x128xf32>
    %c1_40 = arith.constant 1 : index
    %c0_41 = arith.constant 0 : index
    %c0_42 = arith.constant 0 : index
    %74 = vector.load %arg10[%c1_40, %c0_41, %c0_42] : memref<2x8x128xf32, #tpu.memory_space<vmem>>, vector<1x8x128xf32>
    %75 = vector.shape_cast %74 : vector<1x8x128xf32> to vector<8x128xf32>
    %76 = vector.shape_cast %73 : vector<8x128xf32> to vector<1x8x128xf32>
    tpu.vector_store %arg10[%c1_40, %c0_41, %c0_42], %76 {strides = array<i32>} : memref<2x8x128xf32, #tpu.memory_space<vmem>>, vector<1x8x128xf32>,
    %77 = vector.broadcast %5 : vector<1x128xf32> to vector<8x128xf32>
    %78 = arith.subf %77, %73 : vector<8x128xf32>
    %79 = arith.mulf %78, %78 : vector<8x128xf32>
    %cst_43 = arith.constant 0.000000e+00 : f32
    %80 = vector.broadcast %cst_43 : f32 to vector<8x128xf32>
    %81 = arith.subf %80, %79 : vector<8x128xf32>
    %cst_44 = arith.constant 1.000000e+02 : f32
    %82 = vector.broadcast %cst_44 : f32 to vector<8x128xf32>
    %83 = arith.mulf %81, %82 : vector<8x128xf32>
    %84 = math.exp %83 : vector<8x128xf32>
    %cst_45 = arith.constant dense<0.000000e+00> : vector<8x512xf32>
    %85 = tpu.matmul %84, %7, %cst_45 {dimension_numbers = #tpu.dot_dimension_numbers<[1], [0], [0], [1], [0, 0, 1, 1], [], []>} : vector<8x128xf32>, vector<128x512xf32>, vector<8x512xf32> -> vector<8x512xf32>
    %86 = vector.extract_strided_slice %85 {offsets = [0, 0], sizes = [8, 256], strides = [1, 1]} : vector<8x512xf32> to vector<8x256xf32>
    %87 = vector.extract_strided_slice %85 {offsets = [0, 256], sizes = [8, 256], strides = [1, 1]} : vector<8x512xf32> to vector<8x256xf32>
    %88 = arith.mulf %86, %87 : vector<8x256xf32>
    %c1_46 = arith.constant 1 : index
    %c0_47 = arith.constant 0 : index
    %c0_48 = arith.constant 0 : index
    %89 = vector.load %arg11[%c1_46, %c0_47, %c0_48] : memref<2x8x256xf32, #tpu.memory_space<vmem>>, vector<1x8x256xf32>
    %90 = vector.shape_cast %89 : vector<1x8x256xf32> to vector<8x256xf32>
    %91 = vector.shape_cast %88 : vector<8x256xf32> to vector<1x8x256xf32>
    tpu.vector_store %arg11[%c1_46, %c0_47, %c0_48], %91 {strides = array<i32>} : memref<2x8x256xf32, #tpu.memory_space<vmem>>, vector<1x8x256xf32>,
    return
  }
  func.func @transform_0(%arg0: i32) -> (i32, i32, i32) {
    %c0_i32 = arith.constant 0 : i32
    %c0_i32_0 = arith.constant 0 : i32
    %c0_i32_1 = arith.constant 0 : i32
    return %arg0, %c0_i32, %c0_i32_0 : i32, i32, i32
  }
  func.func @transform_1(%arg0: i32) -> (i32, i32) {
    %c0_i32 = arith.constant 0 : i32
    %c0_i32_0 = arith.constant 0 : i32
    %c0_i32_1 = arith.constant 0 : i32
    return %c0_i32, %c0_i32_0 : i32, i32
  }
  func.func @transform_2(%arg0: i32) -> (i32, i32) {
    %c0_i32 = arith.constant 0 : i32
    %c0_i32_0 = arith.constant 0 : i32
    %c0_i32_1 = arith.constant 0 : i32
    return %c0_i32, %c0_i32_0 : i32, i32
  }
  func.func @transform_3(%arg0: i32) -> (i32, i32) {
    %c0_i32 = arith.constant 0 : i32
    %c0_i32_0 = arith.constant 0 : i32
    %c0_i32_1 = arith.constant 0 : i32
    return %c0_i32, %c0_i32_0 : i32, i32
  }
  func.func @transform_4(%arg0: i32) -> (i32, i32) {
    %c0_i32 = arith.constant 0 : i32
    %c0_i32_0 = arith.constant 0 : i32
    %c0_i32_1 = arith.constant 0 : i32
    return %c0_i32, %c0_i32_0 : i32, i32
  }
  func.func @transform_5(%arg0: i32) -> (i32, i32) {
    %c0_i32 = arith.constant 0 : i32
    %c0_i32_0 = arith.constant 0 : i32
    %c0_i32_1 = arith.constant 0 : i32
    return %c0_i32, %c0_i32_0 : i32, i32
  }
  func.func @transform_6(%arg0: i32) -> (i32, i32) {
    %c0_i32 = arith.constant 0 : i32
    %c0_i32_0 = arith.constant 0 : i32
    %c0_i32_1 = arith.constant 0 : i32
    return %c0_i32, %c0_i32_0 : i32, i32
  }
  func.func @transform_7(%arg0: i32) -> (i32, i32) {
    %c0_i32 = arith.constant 0 : i32
    %c0_i32_0 = arith.constant 0 : i32
    %c0_i32_1 = arith.constant 0 : i32
    return %c0_i32, %c0_i32_0 : i32, i32
  }
  func.func @transform_8(%arg0: i32) -> (i32, i32) {
    %c0_i32 = arith.constant 0 : i32
    %c0_i32_0 = arith.constant 0 : i32
    %c0_i32_1 = arith.constant 0 : i32
    return %c0_i32, %c0_i32_0 : i32, i32
  }
  func.func @transform_9(%arg0: i32) -> (i32, i32, i32) {
    %c0_i32 = arith.constant 0 : i32
    %c0_i32_0 = arith.constant 0 : i32
    %c0_i32_1 = arith.constant 0 : i32
    return %arg0, %c0_i32, %c0_i32_0 : i32, i32, i32
  }
  func.func @transform_10(%arg0: i32) -> (i32, i32, i32) {
    %c0_i32 = arith.constant 0 : i32
    %c0_i32_0 = arith.constant 0 : i32
    %c0_i32_1 = arith.constant 0 : i32
    return %arg0, %c0_i32, %c0_i32_0 : i32, i32, i32
  }
}

</mosaic_0001>

<llo_original>
// kernel: tpu_custom_call.1
$region0: #{tpu_custom_call.1}
  #allocation0 [shape = 'u32[]', space=smem, size = 0x4, offset = 0x4, fixed_abs, tag = 'smem constant byte address 0x4 - core index']
  #allocation1 [shape = 'u32[144,128]{1,0:T(1,128)}', space=vmem, size = 0x12000, scoped, tag = 'internal scratch']
  %s0 = inlined_call_operand.vmem [shape: f32[2,4,256], index: 0, kind: input, shape index: {}]
  %s1 = inlined_call_operand.vmem [shape: f32[32,4], index: 1, kind: input, shape index: {}]
  %s2 = inlined_call_operand.vmem [shape: f32[32,1], index: 2, kind: input, shape index: {}]
  %s3 = inlined_call_operand.vmem [shape: f32[8,32], index: 3, kind: input, shape index: {}]
  %s4 = inlined_call_operand.vmem [shape: f32[8,1], index: 4, kind: input, shape index: {}]
  %s5 = inlined_call_operand.hbm [shape: f32[256,128], index: 5, kind: input, shape index: {}]
  %s6 = inlined_call_operand.vmem [shape: f32[1,128], index: 6, kind: input, shape index: {}]
  %s7 = inlined_call_operand.vmem [shape: f32[1,128], index: 7, kind: input, shape index: {}]
  %s8 = inlined_call_operand.hbm [shape: f32[128,512], index: 8, kind: input, shape index: {}]
  %s9 = inlined_call_operand.hbm [shape: f32[2,8,128], index: 9, kind: output, shape index: {0}]
  %s10 = inlined_call_operand.hbm [shape: f32[2,8,256], index: 10, kind: output, shape index: {1}]
  %11 = xla_tuple %s9, %s10
  %s12 = sld [smem:[#allocation0]]
  $region62: #{tpu_custom_call.1} parent=0
    _
  %s14 = ssub.s32 1, %s12
  %s15 = scalar_select 0, %s14, %s12
  $region1: #{tpu_custom_call.1} parent=0
    #allocation2 [shape = 'u8[131072]{0}', space=vmem, size = 0x20000, scoped, tag = 'input window, operand 5, single buffered']
    #allocation3 [shape = 's32[1]{0}', space=sflag, size = 0x4, scoped, tag = 'scoped memory for tpu_custom_call.1']
    #allocation4 [shape = 's32[1]{0}', space=sflag, size = 0x4, scoped, tag = 'scoped memory for tpu_custom_call.1']
    #allocation5 [shape = 'u8[262144]{0}', space=vmem, size = 0x40000, scoped, tag = 'input window, operand 8, single buffered']
    #allocation6 [shape = 's32[1]{0}', space=sflag, size = 0x4, scoped, tag = 'scoped memory for tpu_custom_call.1']
    #allocation7 [shape = 'u8[8192]{0}', space=vmem, size = 0x2000, scoped, tag = 'output window, operand 0, single buffered']
    #allocation8 [shape = 'u8[16384]{0}', space=vmem, size = 0x4000, scoped, tag = 'output window, operand 1, single buffered']
    #allocation9 [shape = 's32[1]{0}', space=sflag, size = 0x4, scoped, tag = 'scoped memory for tpu_custom_call.1']
    %16 = vsyncpa [#allocation3], 0
    %17 = vsyncpa [#allocation6], 0
    %18 = vsyncpa [#allocation4], 0
    %19 = vsyncpa [#allocation9], 0
    // Predicated region
    $region2: #{tpu_custom_call.1} parent=1 // pred_check
      _
    $region3: #{tpu_custom_call.1} parent=1 // pred_check_branch
      %21 = sbr.rel (0) target = $region5
    $region4: #{tpu_custom_call.1} parent=1 // pred_region
      _
    $region5: #{tpu_custom_call.1} parent=1 // pred_fallthru
      _
    // Predicated region
    $region6: #{tpu_custom_call.1} parent=1 // pred_check
      _
    $region7: #{tpu_custom_call.1} parent=1 // pred_check_branch
      %23 = sbr.rel (0) target = $region9
    $region8: #{tpu_custom_call.1} parent=1 // pred_region
      _
    $region9: #{tpu_custom_call.1} parent=1 // pred_fallthru
      _
    // Predicated region
    $region10: #{tpu_custom_call.1} parent=1 // pred_check
      _
    $region11: #{tpu_custom_call.1} parent=1 // pred_check_branch
      %25 = sbr.rel (0) target = $region13
    $region12: #{tpu_custom_call.1} parent=1 // pred_region
      _
    $region13: #{tpu_custom_call.1} parent=1 // pred_fallthru
      _
    // Predicated region
    $region14: #{tpu_custom_call.1} parent=1 // pred_check
      _
    $region15: #{tpu_custom_call.1} parent=1 // pred_check_branch
      %27 = sbr.rel (0) target = $region17
    $region16: #{tpu_custom_call.1} parent=1 // pred_region
      _
    $region17: #{tpu_custom_call.1} parent=1 // pred_fallthru
      _
    // Predicated region
    $region18: #{tpu_custom_call.1} parent=1 // pred_check
      _
    $region19: #{tpu_custom_call.1} parent=1 // pred_check_branch
      %29 = sbr.rel (0) target = $region21
    $region20: #{tpu_custom_call.1} parent=1 // pred_region
      _
    $region21: #{tpu_custom_call.1} parent=1 // pred_fallthru
      _
    // Predicated region
    $region22: #{tpu_custom_call.1} parent=1 // pred_check
      _
    $region23: #{tpu_custom_call.1} parent=1 // pred_check_branch
      %31 = sbr.rel (0) target = $region25
    $region24: #{tpu_custom_call.1} parent=1 // pred_region
      %s33 = ssub.s32 4096, 4096
      %34 = vsyncadd [#allocation3], %s33
      %s35 = sshll.u32 [#allocation2], 4
      %s36 = int_to_ptr.vmem [resolvable:$true] %s35
      %41 = dma.hbm_to_vmem [thread:$0]  %s5, 4096, %s36, [#allocation3], 128, 128, 8
    $region25: #{tpu_custom_call.1} parent=1 // pred_fallthru
      _
    // Predicated region
    $region26: #{tpu_custom_call.1} parent=1 // pred_check
      _
    $region27: #{tpu_custom_call.1} parent=1 // pred_check_branch
      %43 = sbr.rel (0) target = $region29
    $region28: #{tpu_custom_call.1} parent=1 // pred_region
      _
    $region29: #{tpu_custom_call.1} parent=1 // pred_fallthru
      _
    // Predicated region
    $region30: #{tpu_custom_call.1} parent=1 // pred_check
      _
    $region31: #{tpu_custom_call.1} parent=1 // pred_check_branch
      %45 = sbr.rel (0) target = $region33
    $region32: #{tpu_custom_call.1} parent=1 // pred_region
      _
    $region33: #{tpu_custom_call.1} parent=1 // pred_fallthru
      _
    // Predicated region
    $region34: #{tpu_custom_call.1} parent=1 // pred_check
      _
    $region35: #{tpu_custom_call.1} parent=1 // pred_check_branch
      %47 = sbr.rel (0) target = $region37
    $region36: #{tpu_custom_call.1} parent=1 // pred_region
      %s49 = ssub.s32 8192, 8192
      %50 = vsyncadd [#allocation6], %s49
      %s51 = sshll.u32 [#allocation5], 4
      %s52 = int_to_ptr.vmem [resolvable:$true] %s51
      %57 = dma.hbm_to_vmem [thread:$0]  %s8, 8192, %s52, [#allocation6], 512, 512, 32
    $region37: #{tpu_custom_call.1} parent=1 // pred_fallthru
      _
    // Predicated region
    $region38: #{tpu_custom_call.1} parent=1 // pred_check
      _
    $region39: #{tpu_custom_call.1} parent=1 // pred_check_branch
      %59 = sbr.rel (0) target = $region41
    $region40: #{tpu_custom_call.1} parent=1 // pred_region
      %60 = dma.done [#allocation3], 4096
    $region41: #{tpu_custom_call.1} parent=1 // pred_fallthru
      _
    // Predicated region
    $region42: #{tpu_custom_call.1} parent=1 // pred_check
      _
    $region43: #{tpu_custom_call.1} parent=1 // pred_check_branch
      %62 = sbr.rel (0) target = $region45
    $region44: #{tpu_custom_call.1} parent=1 // pred_region
      %63 = dma.done [#allocation6], 8192
    $region45: #{tpu_custom_call.1} parent=1 // pred_fallthru
      _
    %v64 = vld [vmem:[%s1] sm:$0xff]
    %v65 = vld [vmem:[%s1 + $0x8] sm:$0xff]
    %v66 = vld [vmem:[%s1 + $0x10] sm:$0xff]
    %v67 = vld [vmem:[%s1 + $0x18] sm:$0xff]
    %v68 = vld [vmem:[%s2] sm:$0xff]
    %v69 = vld [vmem:[%s2 + $0x8] sm:$0xff]
    %v70 = vld [vmem:[%s2 + $0x10] sm:$0xff]
    %v71 = vld [vmem:[%s2 + $0x18] sm:$0xff]
    %v72 = vld [vmem:[%s3] sm:$0xff]
    %v73 = vld [vmem:[%s4] sm:$0xff]
    %v74 = vld [vmem:[#allocation2] sm:$0xff]
    %v75 = vld [vmem:[#allocation2 + $0x8] sm:$0xff]
    %v76 = vld [vmem:[#allocation2 + $0x10] sm:$0xff]
    %v77 = vld [vmem:[#allocation2 + $0x18] sm:$0xff]
    %v78 = vld [vmem:[#allocation2 + $0x20] sm:$0xff]
    %v79 = vld [vmem:[#allocation2 + $0x28] sm:$0xff]
    %v80 = vld [vmem:[#allocation2 + $0x30] sm:$0xff]
    %v81 = vld [vmem:[#allocation2 + $0x38] sm:$0xff]
    %v82 = vld [vmem:[#allocation2 + $0x40] sm:$0xff]
    %v83 = vld [vmem:[#allocation2 + $0x48] sm:$0xff]
    %v84 = vld [vmem:[#allocation2 + $0x50] sm:$0xff]
    %v85 = vld [vmem:[#allocation2 + $0x58] sm:$0xff]
    %v86 = vld [vmem:[#allocation2 + $0x60] sm:$0xff]
    %v87 = vld [vmem:[#allocation2 + $0x68] sm:$0xff]
    %v88 = vld [vmem:[#allocation2 + $0x70] sm:$0xff]
    %v89 = vld [vmem:[#allocation2 + $0x78] sm:$0xff]
    %v90 = vld [vmem:[#allocation2 + $0x80] sm:$0xff]
    %v91 = vld [vmem:[#allocation2 + $0x88] sm:$0xff]
    %v92 = vld [vmem:[#allocation2 + $0x90] sm:$0xff]
    %v93 = vld [vmem:[#allocation2 + $0x98] sm:$0xff]
    %v94 = vld [vmem:[#allocation2 + $0xa0] sm:$0xff]
    %v95 = vld [vmem:[#allocation2 + $0xa8] sm:$0xff]
    %v96 = vld [vmem:[#allocation2 + $0xb0] sm:$0xff]
    %v97 = vld [vmem:[#allocation2 + $0xb8] sm:$0xff]
    %v98 = vld [vmem:[#allocation2 + $0xc0] sm:$0xff]
    %v99 = vld [vmem:[#allocation2 + $0xc8] sm:$0xff]
    %v100 = vld [vmem:[#allocation2 + $0xd0] sm:$0xff]
    %v101 = vld [vmem:[#allocation2 + $0xd8] sm:$0xff]
    %v102 = vld [vmem:[#allocation2 + $0xe0] sm:$0xff]
    %v103 = vld [vmem:[#allocation2 + $0xe8] sm:$0xff]
    %v104 = vld [vmem:[#allocation2 + $0xf0] sm:$0xff]
    %v105 = vld [vmem:[#allocation2 + $0xf8] sm:$0xff]
    %v106 = vld [vmem:[%s6] sm:$0x1]
    %v107 = vld [vmem:[%s7] sm:$0x1]
    %v108 = vld [vmem:[#allocation5] sm:$0xff]
    %v109 = vld [vmem:[#allocation5 + $0x8] sm:$0xff]
    %v110 = vld [vmem:[#allocation5 + $0x10] sm:$0xff]
    %v111 = vld [vmem:[#allocation5 + $0x18] sm:$0xff]
    %v112 = vld [vmem:[#allocation5 + $0x20] sm:$0xff]
    %v113 = vld [vmem:[#allocation5 + $0x28] sm:$0xff]
    %v114 = vld [vmem:[#allocation5 + $0x30] sm:$0xff]
    %v115 = vld [vmem:[#allocation5 + $0x38] sm:$0xff]
    %v116 = vld [vmem:[#allocation5 + $0x40] sm:$0xff]
    %v117 = vld [vmem:[#allocation5 + $0x48] sm:$0xff]
    %v118 = vld [vmem:[#allocation5 + $0x50] sm:$0xff]
    %v119 = vld [vmem:[#allocation5 + $0x58] sm:$0xff]
    %v120 = vld [vmem:[#allocation5 + $0x60] sm:$0xff]
    %v121 = vld [vmem:[#allocation5 + $0x68] sm:$0xff]
    %v122 = vld [vmem:[#allocation5 + $0x70] sm:$0xff]
    %v123 = vld [vmem:[#allocation5 + $0x78] sm:$0xff]
    %v124 = vld [vmem:[#allocation5 + $0x80] sm:$0xff]
    %v125 = vld [vmem:[#allocation5 + $0x88] sm:$0xff]
    %v126 = vld [vmem:[#allocation5 + $0x90] sm:$0xff]
    %v127 = vld [vmem:[#allocation5 + $0x98] sm:$0xff]
    %v128 = vld [vmem:[#allocation5 + $0xa0] sm:$0xff]
    %v129 = vld [vmem:[#allocation5 + $0xa8] sm:$0xff]
    %v130 = vld [vmem:[#allocation5 + $0xb0] sm:$0xff]
    %v131 = vld [vmem:[#allocation5 + $0xb8] sm:$0xff]
    %v132 = vld [vmem:[#allocation5 + $0xc0] sm:$0xff]
    %v133 = vld [vmem:[#allocation5 + $0xc8] sm:$0xff]
    %v134 = vld [vmem:[#allocation5 + $0xd0] sm:$0xff]
    %v135 = vld [vmem:[#allocation5 + $0xd8] sm:$0xff]
    %v136 = vld [vmem:[#allocation5 + $0xe0] sm:$0xff]
    %v137 = vld [vmem:[#allocation5 + $0xe8] sm:$0xff]
    %v138 = vld [vmem:[#allocation5 + $0xf0] sm:$0xff]
    %v139 = vld [vmem:[#allocation5 + $0xf8] sm:$0xff]
    %v140 = vld [vmem:[#allocation5 + $0x100] sm:$0xff]
    %v141 = vld [vmem:[#allocation5 + $0x108] sm:$0xff]
    %v142 = vld [vmem:[#allocation5 + $0x110] sm:$0xff]
    %v143 = vld [vmem:[#allocation5 + $0x118] sm:$0xff]
    %v144 = vld [vmem:[#allocation5 + $0x120] sm:$0xff]
    %v145 = vld [vmem:[#allocation5 + $0x128] sm:$0xff]
    %v146 = vld [vmem:[#allocation5 + $0x130] sm:$0xff]
    %v147 = vld [vmem:[#allocation5 + $0x138] sm:$0xff]
    %v148 = vld [vmem:[#allocation5 + $0x140] sm:$0xff]
    %v149 = vld [vmem:[#allocation5 + $0x148] sm:$0xff]
    %v150 = vld [vmem:[#allocation5 + $0x150] sm:$0xff]
    %v151 = vld [vmem:[#allocation5 + $0x158] sm:$0xff]
    %v152 = vld [vmem:[#allocation5 + $0x160] sm:$0xff]
    %v153 = vld [vmem:[#allocation5 + $0x168] sm:$0xff]
    %v154 = vld [vmem:[#allocation5 + $0x170] sm:$0xff]
    %v155 = vld [vmem:[#allocation5 + $0x178] sm:$0xff]
    %v156 = vld [vmem:[#allocation5 + $0x180] sm:$0xff]
    %v157 = vld [vmem:[#allocation5 + $0x188] sm:$0xff]
    %v158 = vld [vmem:[#allocation5 + $0x190] sm:$0xff]
    %v159 = vld [vmem:[#allocation5 + $0x198] sm:$0xff]
    %v160 = vld [vmem:[#allocation5 + $0x1a0] sm:$0xff]
    %v161 = vld [vmem:[#allocation5 + $0x1a8] sm:$0xff]
    %v162 = vld [vmem:[#allocation5 + $0x1b0] sm:$0xff]
    %v163 = vld [vmem:[#allocation5 + $0x1b8] sm:$0xff]
    %v164 = vld [vmem:[#allocation5 + $0x1c0] sm:$0xff]
    %v165 = vld [vmem:[#allocation5 + $0x1c8] sm:$0xff]
    %v166 = vld [vmem:[#allocation5 + $0x1d0] sm:$0xff]
    %v167 = vld [vmem:[#allocation5 + $0x1d8] sm:$0xff]
    %v168 = vld [vmem:[#allocation5 + $0x1e0] sm:$0xff]
    %v169 = vld [vmem:[#allocation5 + $0x1e8] sm:$0xff]
    %v170 = vld [vmem:[#allocation5 + $0x1f0] sm:$0xff]
    %v171 = vld [vmem:[#allocation5 + $0x1f8] sm:$0xff]
    %v172 = vld [vmem:[%s0] sm:$0xff]
    %174 = vset.pattern.permute.xlu0 0
    %175 = vperm.xlu0 %174, %v68
    %v176 = vpop.permute.xlu0 %175
    %179 = vset.pattern.permute.xlu0 0
    %180 = vperm.xlu0 %179, %v69
    %v181 = vpop.permute.xlu0 %180
    %184 = vset.pattern.permute.xlu0 0
    %185 = vperm.xlu0 %184, %v70
    %v186 = vpop.permute.xlu0 %185
    %189 = vset.pattern.permute.xlu0 0
    %190 = vperm.xlu0 %189, %v71
    %v191 = vpop.permute.xlu0 %190
    %v194 = vcombine.high %v172, %v172
    %vm195 = vcmask 31744
    %v197 = vsel %vm195, %v64, 0
    %v200 = vsel %vm195, %v65, 0
    %v203 = vsel %vm195, %v66, 0
    %v206 = vsel %vm195, %v67, 0
    %vm208 = vcmask 1043456
    %v209 = vsel %vm208, %v172, 0
    %v211 = vsel %vm208, %v194, 0
    %213 = vmatprep.subr.mxu0 %v211
    %214 = vmatpush1.msra.mxu0 %v209
    %215 = vmatprep.subr.mxu0 0.0
    %216 = vmatpush1.msra.mxu0 0.0
    %217 = vmatprep.subr.mxu0 0.0
    %218 = vmatpush1.msra.mxu0 0.0
    %219 = vmatprep.subr.mxu0 0.0
    %220 = vmatpush1.msra.mxu0 0.0
    %221 = vmatprep.subr.mxu0 0.0
    %222 = vmatpush1.msra.mxu0 0.0
    %223 = vmatprep.subr.mxu0 0.0
    %224 = vmatpush1.msra.mxu0 0.0
    %225 = vmatprep.subr.mxu0 0.0
    %226 = vmatpush1.msra.mxu0 0.0
    %227 = vmatprep.subr.mxu0 0.0
    %228 = vmatpush1.msra.mxu0 0.0
    %229 = vmatprep.subr.mxu0 0.0
    %230 = vmatpush1.msra.mxu0 0.0
    %231 = vmatprep.subr.mxu0 0.0
    %232 = vmatpush1.msra.mxu0 0.0
    %233 = vmatprep.subr.mxu0 0.0
    %234 = vmatpush1.msra.mxu0 0.0
    %235 = vmatprep.subr.mxu0 0.0
    %236 = vmatpush1.msra.mxu0 0.0
    %237 = vmatprep.subr.mxu0 0.0
    %238 = vmatpush1.msra.mxu0 0.0
    %239 = vmatprep.subr.mxu0 0.0
    %240 = vmatpush1.msra.mxu0 0.0
    %241 = vmatprep.subr.mxu0 0.0
    %242 = vmatpush1.msra.mxu0 0.0
    %243 = vmatprep.subr.mxu0 0.0
    %244 = vmatpush1.msra.mxu0 0.0
    %245 = vmatprep.subr.mxu0 0.0
    %246 = vmatpush1.msra.mxu0 0.0
    %247 = vmatprep.subr.mxu0 0.0
    %248 = vmatpush1.msra.mxu0 0.0
    %249 = vmatprep.subr.mxu0 0.0
    %250 = vmatpush1.msra.mxu0 0.0
    %251 = vmatprep.subr.mxu0 0.0
    %252 = vmatpush1.msra.mxu0 0.0
    %253 = vmatprep.subr.mxu0 0.0
    %254 = vmatpush1.msra.mxu0 0.0
    %255 = vmatprep.subr.mxu0 0.0
    %256 = vmatpush1.msra.mxu0 0.0
    %257 = vmatprep.subr.mxu0 0.0
    %258 = vmatpush1.msra.mxu0 0.0
    %259 = vmatprep.subr.mxu0 0.0
    %260 = vmatpush1.msra.mxu0 0.0
    %261 = vmatprep.subr.mxu0 0.0
    %262 = vmatpush1.msra.mxu0 0.0
    %263 = vmatprep.subr.mxu0 0.0
    %264 = vmatpush1.msra.mxu0 0.0
    %265 = vmatprep.subr.mxu0 0.0
    %266 = vmatpush1.msra.mxu0 0.0
    %267 = vmatprep.subr.mxu0 0.0
    %268 = vmatpush1.msra.mxu0 0.0
    %269 = vmatprep.subr.mxu0 0.0
    %270 = vmatpush1.msra.mxu0 0.0
    %271 = vmatprep.subr.mxu0 0.0
    %272 = vmatpush1.msra.mxu0 0.0
    %273 = vmatprep.subr.mxu0 0.0
    %274 = vmatpush1.msra.mxu0 0.0
    %275 = vmatprep.subr.mxu0 0.0
    %276 = vmatpush1.msra.mxu0 0.0
    %277 = vmatprep.mubr.f32.mxu0 0.0
    %278 = vmatmul.mubr.f32.gmra.mrb[0].mxu0 %v197
    %v279 = vpop.f32.mrb[0].mxu0
    %v280 = vadd.f32 %v176, %v279
    %v281 = vpop.f32.mrb[0].mxu0
    %v282 = vadd.f32 %v176, %v281
    %283 = vmatprep.mubr.f32.mxu0 0.0
    %284 = vmatmul.mubr.f32.gmra.mrb[0].mxu0 %v200
    %v285 = vpop.f32.mrb[0].mxu0
    %v286 = vadd.f32 %v181, %v285
    %v287 = vpop.f32.mrb[0].mxu0
    %v288 = vadd.f32 %v181, %v287
    %289 = vmatprep.mubr.f32.mxu0 0.0
    %290 = vmatmul.mubr.f32.gmra.mrb[0].mxu0 %v203
    %v291 = vpop.f32.mrb[0].mxu0
    %v292 = vadd.f32 %v186, %v291
    %v293 = vpop.f32.mrb[0].mxu0
    %v294 = vadd.f32 %v186, %v293
    %295 = vmatprep.mubr.f32.mxu0 0.0
    %296 = vmatmul.mubr.f32.gmra.mrb[0].mxu0 %v206
    %v297 = vpop.f32.mrb[0].mxu0
    %v298 = vadd.f32 %v191, %v297
    %v299 = vpop.f32.mrb[0].mxu0
    %v300 = vadd.f32 %v191, %v299
    %301 = vdwg.mxu0
    %v302 = vmax.f32 %v280, 0.0
    %v303 = vmax.f32 %v282, 0.0
    %v304 = vmax.f32 %v286, 0.0
    %v305 = vmax.f32 %v288, 0.0
    %v306 = vmax.f32 %v292, 0.0
    %v307 = vmax.f32 %v294, 0.0
    %v308 = vmax.f32 %v298, 0.0
    %v309 = vmax.f32 %v300, 0.0
    %311 = vset.pattern.permute.xlu0 0
    %312 = vperm.xlu0 %311, %v73
    %v313 = vpop.permute.xlu0 %312
    %vm315 = vcmask 261120
    %v317 = vsel %vm315, %v72, 0
    %319 = vmatprep.subr.mxu0 %v303
    %320 = vmatpush1.msra.mxu0 %v302
    %321 = vmatprep.subr.mxu0 %v305
    %322 = vmatpush1.msra.mxu0 %v304
    %323 = vmatprep.subr.mxu0 %v307
    %324 = vmatpush1.msra.mxu0 %v306
    %325 = vmatprep.subr.mxu0 %v309
    %326 = vmatpush1.msra.mxu0 %v308
    %327 = vmatprep.subr.mxu0 0.0
    %328 = vmatpush1.msra.mxu0 0.0
    %329 = vmatprep.subr.mxu0 0.0
    %330 = vmatpush1.msra.mxu0 0.0
    %331 = vmatprep.subr.mxu0 0.0
    %332 = vmatpush1.msra.mxu0 0.0
    %333 = vmatprep.subr.mxu0 0.0
    %334 = vmatpush1.msra.mxu0 0.0
    %335 = vmatprep.subr.mxu0 0.0
    %336 = vmatpush1.msra.mxu0 0.0
    %337 = vmatprep.subr.mxu0 0.0
    %338 = vmatpush1.msra.mxu0 0.0
    %339 = vmatprep.subr.mxu0 0.0
    %340 = vmatpush1.msra.mxu0 0.0
    %341 = vmatprep.subr.mxu0 0.0
    %342 = vmatpush1.msra.mxu0 0.0
    %343 = vmatprep.subr.mxu0 0.0
    %344 = vmatpush1.msra.mxu0 0.0
    %345 = vmatprep.subr.mxu0 0.0
    %346 = vmatpush1.msra.mxu0 0.0
    %347 = vmatprep.subr.mxu0 0.0
    %348 = vmatpush1.msra.mxu0 0.0
    %349 = vmatprep.subr.mxu0 0.0
    %350 = vmatpush1.msra.mxu0 0.0
    %351 = vmatprep.subr.mxu0 0.0
    %352 = vmatpush1.msra.mxu0 0.0
    %353 = vmatprep.subr.mxu0 0.0
    %354 = vmatpush1.msra.mxu0 0.0
    %355 = vmatprep.subr.mxu0 0.0
    %356 = vmatpush1.msra.mxu0 0.0
    %357 = vmatprep.subr.mxu0 0.0
    %358 = vmatpush1.msra.mxu0 0.0
    %359 = vmatprep.subr.mxu0 0.0
    %360 = vmatpush1.msra.mxu0 0.0
    %361 = vmatprep.subr.mxu0 0.0
    %362 = vmatpush1.msra.mxu0 0.0
    %363 = vmatprep.subr.mxu0 0.0
    %364 = vmatpush1.msra.mxu0 0.0
    %365 = vmatprep.subr.mxu0 0.0
    %366 = vmatpush1.msra.mxu0 0.0
    %367 = vmatprep.subr.mxu0 0.0
    %368 = vmatpush1.msra.mxu0 0.0
    %369 = vmatprep.subr.mxu0 0.0
    %370 = vmatpush1.msra.mxu0 0.0
    %371 = vmatprep.subr.mxu0 0.0
    %372 = vmatpush1.msra.mxu0 0.0
    %373 = vmatprep.subr.mxu0 0.0
    %374 = vmatpush1.msra.mxu0 0.0
    %375 = vmatprep.subr.mxu0 0.0
    %376 = vmatpush1.msra.mxu0 0.0
    %377 = vmatprep.subr.mxu0 0.0
    %378 = vmatpush1.msra.mxu0 0.0
    %379 = vmatprep.subr.mxu0 0.0
    %380 = vmatpush1.msra.mxu0 0.0
    %381 = vmatprep.subr.mxu0 0.0
    %382 = vmatpush1.msra.mxu0 0.0
    %383 = vmatprep.mubr.f32.mxu0 0.0
    %384 = vmatmul.mubr.f32.gmra.mrb[0].mxu0 %v317
    %v385 = vpop.f32.mrb[0].mxu0
    %v386 = vadd.f32 %v313, %v385
    %v387 = vpop.f32.mrb[0].mxu0
    %v388 = vadd.f32 %v313, %v387
    %389 = vdwg.mxu0
    %v391 = vlaneseq
    %v392 = vshrl.u32 %v391, 7
    %v393 = vsub.s32 0, %v392
    %v394 = vrot.slane %v107, %v393
    %396 = vmatprep.subr.mxu0 0.0
    %397 = vmatpush1.msra.mxu0 %v74
    %398 = vmatprep.subr.mxu0 0.0
    %399 = vmatpush1.msra.mxu0 %v75
    %400 = vmatprep.subr.mxu0 0.0
    %401 = vmatpush1.msra.mxu0 %v76
    %402 = vmatprep.subr.mxu0 0.0
    %403 = vmatpush1.msra.mxu0 %v77
    %404 = vmatprep.subr.mxu0 0.0
    %405 = vmatpush1.msra.mxu0 %v78
    %406 = vmatprep.subr.mxu0 0.0
    %407 = vmatpush1.msra.mxu0 %v79
    %408 = vmatprep.subr.mxu0 0.0
    %409 = vmatpush1.msra.mxu0 %v80
    %410 = vmatprep.subr.mxu0 0.0
    %411 = vmatpush1.msra.mxu0 %v81
    %412 = vmatprep.subr.mxu0 0.0
    %413 = vmatpush1.msra.mxu0 %v82
    %414 = vmatprep.subr.mxu0 0.0
    %415 = vmatpush1.msra.mxu0 %v83
    %416 = vmatprep.subr.mxu0 0.0
    %417 = vmatpush1.msra.mxu0 %v84
    %418 = vmatprep.subr.mxu0 0.0
    %419 = vmatpush1.msra.mxu0 %v85
    %420 = vmatprep.subr.mxu0 0.0
    %421 = vmatpush1.msra.mxu0 %v86
    %422 = vmatprep.subr.mxu0 0.0
    %423 = vmatpush1.msra.mxu0 %v87
    %424 = vmatprep.subr.mxu0 0.0
    %425 = vmatpush1.msra.mxu0 %v88
    %426 = vmatprep.subr.mxu0 0.0
    %427 = vmatpush1.msra.mxu0 %v89
    %428 = vmatprep.subr.mxu0 0.0
    %429 = vmatpush1.msra.mxu0 %v90
    %430 = vmatprep.subr.mxu0 0.0
    %431 = vmatpush1.msra.mxu0 %v91
    %432 = vmatprep.subr.mxu0 0.0
    %433 = vmatpush1.msra.mxu0 %v92
    %434 = vmatprep.subr.mxu0 0.0
    %435 = vmatpush1.msra.mxu0 %v93
    %436 = vmatprep.subr.mxu0 0.0
    %437 = vmatpush1.msra.mxu0 %v94
    %438 = vmatprep.subr.mxu0 0.0
    %439 = vmatpush1.msra.mxu0 %v95
    %440 = vmatprep.subr.mxu0 0.0
    %441 = vmatpush1.msra.mxu0 %v96
    %442 = vmatprep.subr.mxu0 0.0
    %443 = vmatpush1.msra.mxu0 %v97
    %444 = vmatprep.subr.mxu0 0.0
    %445 = vmatpush1.msra.mxu0 %v98
    %446 = vmatprep.subr.mxu0 0.0
    %447 = vmatpush1.msra.mxu0 %v99
    %448 = vmatprep.subr.mxu0 0.0
    %449 = vmatpush1.msra.mxu0 %v100
    %450 = vmatprep.subr.mxu0 0.0
    %451 = vmatpush1.msra.mxu0 %v101
    %452 = vmatprep.subr.mxu0 0.0
    %453 = vmatpush1.msra.mxu0 %v102
    %454 = vmatprep.subr.mxu0 0.0
    %455 = vmatpush1.msra.mxu0 %v103
    %456 = vmatprep.subr.mxu0 0.0
    %457 = vmatpush1.msra.mxu0 %v104
    %458 = vmatprep.subr.mxu0 0.0
    %459 = vmatpush1.msra.mxu0 %v105
    %460 = vmatprep.mubr.f32.mxu0 %v388
    %461 = vmatmul.mubr.f32.gmra.mrb[0].mxu0 %v386
    %v462 = vpop.f32.mrb[0].mxu0
    %v463 = vadd.f32 %v394, %v462
    %v464 = vpop.f32.mrb[0].mxu0
    %465 = vdwg.mxu0
    %466 = vmax.xlane.f32.xlu0 %v463
    %v467 = vpop.xlane.xlu0 %466
    %v468 = vsub.f32 %v463, %v467
    %v469 = vmul.f32 %v468, 1.442695
    %v470 = vpow.pop %v469
    %471 = vadd.xlane.f32.xlu0 %v470
    %v472 = vpop.xlane.xlu0 %471
    %v473 = vrcp.pop %v472
    %v474 = vmul.f32 %v470, %v473
    %v476 = vlaneseq
    %v477 = vshrl.u32 %v476, 7
    %v478 = vsub.s32 0, %v477
    %v479 = vrot.slane %v106, %v478
    %v481 = vmul.f32 %v474, %v479
    %482 = vst [vmem:[#allocation7] sm:$0xff] %v481
    %v483 = vsub.f32 %v479, %v481
    %v484 = vmul.f32 %v483, %v483
    %v485 = vsub.f32 0.0, %v484
    %v486 = vmul.f32 %v485, 100.0
    %v487 = vmul.f32 %v486, 1.442695
    %v488 = vpow.pop %v487
    %489 = vmatprep.subr.mxu0 %v109
    %490 = vmatpush1.msra.mxu0 %v108
    %491 = vmatprep.subr.mxu0 %v113
    %492 = vmatpush1.msra.mxu0 %v112
    %493 = vmatprep.subr.mxu0 %v117
    %494 = vmatpush1.msra.mxu0 %v116
    %495 = vmatprep.subr.mxu0 %v121
    %496 = vmatpush1.msra.mxu0 %v120
    %497 = vmatprep.subr.mxu0 %v125
    %498 = vmatpush1.msra.mxu0 %v124
    %499 = vmatprep.subr.mxu0 %v129
    %500 = vmatpush1.msra.mxu0 %v128
    %501 = vmatprep.subr.mxu0 %v133
    %502 = vmatpush1.msra.mxu0 %v132
    %503 = vmatprep.subr.mxu0 %v137
    %504 = vmatpush1.msra.mxu0 %v136
    %505 = vmatprep.subr.mxu0 %v141
    %506 = vmatpush1.msra.mxu0 %v140
    %507 = vmatprep.subr.mxu0 %v145
    %508 = vmatpush1.msra.mxu0 %v144
    %509 = vmatprep.subr.mxu0 %v149
    %510 = vmatpush1.msra.mxu0 %v148
    %511 = vmatprep.subr.mxu0 %v153
    %512 = vmatpush1.msra.mxu0 %v152
    %513 = vmatprep.subr.mxu0 %v157
    %514 = vmatpush1.msra.mxu0 %v156
    %515 = vmatprep.subr.mxu0 %v161
    %516 = vmatpush1.msra.mxu0 %v160
    %517 = vmatprep.subr.mxu0 %v165
    %518 = vmatpush1.msra.mxu0 %v164
    %519 = vmatprep.subr.mxu0 %v169
    %520 = vmatpush1.msra.mxu0 %v168
    %521 = vmatprep.subr.mxu0 0.0
    %522 = vmatpush1.msra.mxu0 0.0
    %523 = vmatprep.subr.mxu0 0.0
    %524 = vmatpush1.msra.mxu0 0.0
    %525 = vmatprep.subr.mxu0 0.0
    %526 = vmatpush1.msra.mxu0 0.0
    %527 = vmatprep.subr.mxu0 0.0
    %528 = vmatpush1.msra.mxu0 0.0
    %529 = vmatprep.subr.mxu0 0.0
    %530 = vmatpush1.msra.mxu0 0.0
    %531 = vmatprep.subr.mxu0 0.0
    %532 = vmatpush1.msra.mxu0 0.0
    %533 = vmatprep.subr.mxu0 0.0
    %534 = vmatpush1.msra.mxu0 0.0
    %535 = vmatprep.subr.mxu0 0.0
    %536 = vmatpush1.msra.mxu0 0.0
    %537 = vmatprep.subr.mxu0 0.0
    %538 = vmatpush1.msra.mxu0 0.0
    %539 = vmatprep.subr.mxu0 0.0
    %540 = vmatpush1.msra.mxu0 0.0
    %541 = vmatprep.subr.mxu0 0.0
    %542 = vmatpush1.msra.mxu0 0.0
    %543 = vmatprep.subr.mxu0 0.0
    %544 = vmatpush1.msra.mxu0 0.0
    %545 = vmatprep.subr.mxu0 0.0
    %546 = vmatpush1.msra.mxu0 0.0
    %547 = vmatprep.subr.mxu0 0.0
    %548 = vmatpush1.msra.mxu0 0.0
    %549 = vmatprep.subr.mxu0 0.0
    %550 = vmatpush1.msra.mxu0 0.0
    %551 = vmatprep.subr.mxu0 0.0
    %552 = vmatpush1.msra.mxu0 0.0
    %553 = vmatprep.mubr.f32.mxu0 0.0
    %554 = vmatmul.mubr.f32.gmra.mrb[0].mxu0 %v488
    %v555 = vpop.f32.mrb[0].mxu0
    %v556 = vadd.f32 0.0, %v555
    %v557 = vpop.f32.mrb[0].mxu0
    %v558 = vadd.f32 0.0, %v557
    %559 = vdwg.mxu0
    %560 = vmatprep.subr.mxu0 %v111
    %561 = vmatpush1.msra.mxu0 %v110
    %562 = vmatprep.subr.mxu0 %v115
    %563 = vmatpush1.msra.mxu0 %v114
    %564 = vmatprep.subr.mxu0 %v119
    %565 = vmatpush1.msra.mxu0 %v118
    %566 = vmatprep.subr.mxu0 %v123
    %567 = vmatpush1.msra.mxu0 %v122
    %568 = vmatprep.subr.mxu0 %v127
    %569 = vmatpush1.msra.mxu0 %v126
    %570 = vmatprep.subr.mxu0 %v131
    %571 = vmatpush1.msra.mxu0 %v130
    %572 = vmatprep.subr.mxu0 %v135
    %573 = vmatpush1.msra.mxu0 %v134
    %574 = vmatprep.subr.mxu0 %v139
    %575 = vmatpush1.msra.mxu0 %v138
    %576 = vmatprep.subr.mxu0 %v143
    %577 = vmatpush1.msra.mxu0 %v142
    %578 = vmatprep.subr.mxu0 %v147
    %579 = vmatpush1.msra.mxu0 %v146
    %580 = vmatprep.subr.mxu0 %v151
    %581 = vmatpush1.msra.mxu0 %v150
    %582 = vmatprep.subr.mxu0 %v155
    %583 = vmatpush1.msra.mxu0 %v154
    %584 = vmatprep.subr.mxu0 %v159
    %585 = vmatpush1.msra.mxu0 %v158
    %586 = vmatprep.subr.mxu0 %v163
    %587 = vmatpush1.msra.mxu0 %v162
    %588 = vmatprep.subr.mxu0 %v167
    %589 = vmatpush1.msra.mxu0 %v166
    %590 = vmatprep.subr.mxu0 %v171
    %591 = vmatpush1.msra.mxu0 %v170
    %592 = vmatprep.subr.mxu0 0.0
    %593 = vmatpush1.msra.mxu0 0.0
    %594 = vmatprep.subr.mxu0 0.0
    %595 = vmatpush1.msra.mxu0 0.0
    %596 = vmatprep.subr.mxu0 0.0
    %597 = vmatpush1.msra.mxu0 0.0
    %598 = vmatprep.subr.mxu0 0.0
    %599 = vmatpush1.msra.mxu0 0.0
    %600 = vmatprep.subr.mxu0 0.0
    %601 = vmatpush1.msra.mxu0 0.0
    %602 = vmatprep.subr.mxu0 0.0
    %603 = vmatpush1.msra.mxu0 0.0
    %604 = vmatprep.subr.mxu0 0.0
    %605 = vmatpush1.msra.mxu0 0.0
    %606 = vmatprep.subr.mxu0 0.0
    %607 = vmatpush1.msra.mxu0 0.0
    %608 = vmatprep.subr.mxu0 0.0
    %609 = vmatpush1.msra.mxu0 0.0
    %610 = vmatprep.subr.mxu0 0.0
    %611 = vmatpush1.msra.mxu0 0.0
    %612 = vmatprep.subr.mxu0 0.0
    %613 = vmatpush1.msra.mxu0 0.0
    %614 = vmatprep.subr.mxu0 0.0
    %615 = vmatpush1.msra.mxu0 0.0
    %616 = vmatprep.subr.mxu0 0.0
    %617 = vmatpush1.msra.mxu0 0.0
    %618 = vmatprep.subr.mxu0 0.0
    %619 = vmatpush1.msra.mxu0 0.0
    %620 = vmatprep.subr.mxu0 0.0
    %621 = vmatpush1.msra.mxu0 0.0
    %622 = vmatprep.subr.mxu0 0.0
    %623 = vmatpush1.msra.mxu0 0.0
    %624 = vmatprep.mubr.f32.mxu0 0.0
    %625 = vmatmul.mubr.f32.gmra.mrb[0].mxu0 %v488
    %v626 = vpop.f32.mrb[0].mxu0
    %v627 = vadd.f32 0.0, %v626
    %v628 = vpop.f32.mrb[0].mxu0
    %v629 = vadd.f32 0.0, %v628
    %630 = vdwg.mxu0
    %v631 = vmul.f32 %v556, %v627
    %v632 = vmul.f32 %v558, %v629
    %633 = vst [vmem:[#allocation8] sm:$0xff] %v631
    %634 = vst [vmem:[#allocation8 + $0x8] sm:$0xff] %v632
    %s635 = scalar_lea.vmem %s0, 8
    %v636 = vld [vmem:[%s635] sm:$0xff]
    %v638 = vcombine.high %v636, %v636
    %v639 = vsel %vm208, %v636, 0
    %v641 = vsel %vm208, %v638, 0
    %643 = vmatprep.subr.mxu0 %v641
    %644 = vmatpush1.msra.mxu0 %v639
    %645 = vmatprep.subr.mxu0 0.0
    %646 = vmatpush1.msra.mxu0 0.0
    %647 = vmatprep.subr.mxu0 0.0
    %648 = vmatpush1.msra.mxu0 0.0
    %649 = vmatprep.subr.mxu0 0.0
    %650 = vmatpush1.msra.mxu0 0.0
    %651 = vmatprep.subr.mxu0 0.0
    %652 = vmatpush1.msra.mxu0 0.0
    %653 = vmatprep.subr.mxu0 0.0
    %654 = vmatpush1.msra.mxu0 0.0
    %655 = vmatprep.subr.mxu0 0.0
    %656 = vmatpush1.msra.mxu0 0.0
    %657 = vmatprep.subr.mxu0 0.0
    %658 = vmatpush1.msra.mxu0 0.0
    %659 = vmatprep.subr.mxu0 0.0
    %660 = vmatpush1.msra.mxu0 0.0
    %661 = vmatprep.subr.mxu0 0.0
    %662 = vmatpush1.msra.mxu0 0.0
    %663 = vmatprep.subr.mxu0 0.0
    %664 = vmatpush1.msra.mxu0 0.0
    %665 = vmatprep.subr.mxu0 0.0
    %666 = vmatpush1.msra.mxu0 0.0
    %667 = vmatprep.subr.mxu0 0.0
    %668 = vmatpush1.msra.mxu0 0.0
    %669 = vmatprep.subr.mxu0 0.0
    %670 = vmatpush1.msra.mxu0 0.0
    %671 = vmatprep.subr.mxu0 0.0
    %672 = vmatpush1.msra.mxu0 0.0
    %673 = vmatprep.subr.mxu0 0.0
    %674 = vmatpush1.msra.mxu0 0.0
    %675 = vmatprep.subr.mxu0 0.0
    %676 = vmatpush1.msra.mxu0 0.0
    %677 = vmatprep.subr.mxu0 0.0
    %678 = vmatpush1.msra.mxu0 0.0
    %679 = vmatprep.subr.mxu0 0.0
    %680 = vmatpush1.msra.mxu0 0.0
    %681 = vmatprep.subr.mxu0 0.0
    %682 = vmatpush1.msra.mxu0 0.0
    %683 = vmatprep.subr.mxu0 0.0
    %684 = vmatpush1.msra.mxu0 0.0
    %685 = vmatprep.subr.mxu0 0.0
    %686 = vmatpush1.msra.mxu0 0.0
    %687 = vmatprep.subr.mxu0 0.0
    %688 = vmatpush1.msra.mxu0 0.0
    %689 = vmatprep.subr.mxu0 0.0
    %690 = vmatpush1.msra.mxu0 0.0
    %691 = vmatprep.subr.mxu0 0.0
    %692 = vmatpush1.msra.mxu0 0.0
    %693 = vmatprep.subr.mxu0 0.0
    %694 = vmatpush1.msra.mxu0 0.0
    %695 = vmatprep.subr.mxu0 0.0
    %696 = vmatpush1.msra.mxu0 0.0
    %697 = vmatprep.subr.mxu0 0.0
    %698 = vmatpush1.msra.mxu0 0.0
    %699 = vmatprep.subr.mxu0 0.0
    %700 = vmatpush1.msra.mxu0 0.0
    %701 = vmatprep.subr.mxu0 0.0
    %702 = vmatpush1.msra.mxu0 0.0
    %703 = vmatprep.subr.mxu0 0.0
    %704 = vmatpush1.msra.mxu0 0.0
    %705 = vmatprep.subr.mxu0 0.0
    %706 = vmatpush1.msra.mxu0 0.0
    %707 = vmatprep.mubr.f32.mxu0 0.0
    %708 = vmatmul.mubr.f32.gmra.mrb[0].mxu0 %v197
    %v709 = vpop.f32.mrb[0].mxu0
    %v710 = vadd.f32 %v176, %v709
    %v711 = vpop.f32.mrb[0].mxu0
    %v712 = vadd.f32 %v176, %v711
    %713 = vmatprep.mubr.f32.mxu0 0.0
    %714 = vmatmul.mubr.f32.gmra.mrb[0].mxu0 %v200
    %v715 = vpop.f32.mrb[0].mxu0
    %v716 = vadd.f32 %v181, %v715
    %v717 = vpop.f32.mrb[0].mxu0
    %v718 = vadd.f32 %v181, %v717
    %719 = vmatprep.mubr.f32.mxu0 0.0
    %720 = vmatmul.mubr.f32.gmra.mrb[0].mxu0 %v203
    %v721 = vpop.f32.mrb[0].mxu0
    %v722 = vadd.f32 %v186, %v721
    %v723 = vpop.f32.mrb[0].mxu0
    %v724 = vadd.f32 %v186, %v723
    %725 = vmatprep.mubr.f32.mxu0 0.0
    %726 = vmatmul.mubr.f32.gmra.mrb[0].mxu0 %v206
    %v727 = vpop.f32.mrb[0].mxu0
    %v728 = vadd.f32 %v191, %v727
    %v729 = vpop.f32.mrb[0].mxu0
    %v730 = vadd.f32 %v191, %v729
    %731 = vdwg.mxu0
    %v732 = vmax.f32 %v710, 0.0
    %v733 = vmax.f32 %v712, 0.0
    %v734 = vmax.f32 %v716, 0.0
    %v735 = vmax.f32 %v718, 0.0
    %v736 = vmax.f32 %v722, 0.0
    %v737 = vmax.f32 %v724, 0.0
    %v738 = vmax.f32 %v728, 0.0
    %v739 = vmax.f32 %v730, 0.0
    %740 = vmatprep.subr.mxu0 %v733
    %741 = vmatpush1.msra.mxu0 %v732
    %742 = vmatprep.subr.mxu0 %v735
    %743 = vmatpush1.msra.mxu0 %v734
    %744 = vmatprep.subr.mxu0 %v737
    %745 = vmatpush1.msra.mxu0 %v736
    %746 = vmatprep.subr.mxu0 %v739
    %747 = vmatpush1.msra.mxu0 %v738
    %748 = vmatprep.subr.mxu0 0.0
    %749 = vmatpush1.msra.mxu0 0.0
    %750 = vmatprep.subr.mxu0 0.0
    %751 = vmatpush1.msra.mxu0 0.0
    %752 = vmatprep.subr.mxu0 0.0
    %753 = vmatpush1.msra.mxu0 0.0
    %754 = vmatprep.subr.mxu0 0.0
    %755 = vmatpush1.msra.mxu0 0.0
    %756 = vmatprep.subr.mxu0 0.0
    %757 = vmatpush1.msra.mxu0 0.0
    %758 = vmatprep.subr.mxu0 0.0
    %759 = vmatpush1.msra.mxu0 0.0
    %760 = vmatprep.subr.mxu0 0.0
    %761 = vmatpush1.msra.mxu0 0.0
    %762 = vmatprep.subr.mxu0 0.0
    %763 = vmatpush1.msra.mxu0 0.0
    %764 = vmatprep.subr.mxu0 0.0
    %765 = vmatpush1.msra.mxu0 0.0
    %766 = vmatprep.subr.mxu0 0.0
    %767 = vmatpush1.msra.mxu0 0.0
    %768 = vmatprep.subr.mxu0 0.0
    %769 = vmatpush1.msra.mxu0 0.0
    %770 = vmatprep.subr.mxu0 0.0
    %771 = vmatpush1.msra.mxu0 0.0
    %772 = vmatprep.subr.mxu0 0.0
    %773 = vmatpush1.msra.mxu0 0.0
    %774 = vmatprep.subr.mxu0 0.0
    %775 = vmatpush1.msra.mxu0 0.0
    %776 = vmatprep.subr.mxu0 0.0
    %777 = vmatpush1.msra.mxu0 0.0
    %778 = vmatprep.subr.mxu0 0.0
    %779 = vmatpush1.msra.mxu0 0.0
    %780 = vmatprep.subr.mxu0 0.0
    %781 = vmatpush1.msra.mxu0 0.0
    %782 = vmatprep.subr.mxu0 0.0
    %783 = vmatpush1.msra.mxu0 0.0
    %784 = vmatprep.subr.mxu0 0.0
    %785 = vmatpush1.msra.mxu0 0.0
    %786 = vmatprep.subr.mxu0 0.0
    %787 = vmatpush1.msra.mxu0 0.0
    %788 = vmatprep.subr.mxu0 0.0
    %789 = vmatpush1.msra.mxu0 0.0
    %790 = vmatprep.subr.mxu0 0.0
    %791 = vmatpush1.msra.mxu0 0.0
    %792 = vmatprep.subr.mxu0 0.0
    %793 = vmatpush1.msra.mxu0 0.0
    %794 = vmatprep.subr.mxu0 0.0
    %795 = vmatpush1.msra.mxu0 0.0
    %796 = vmatprep.subr.mxu0 0.0
    %797 = vmatpush1.msra.mxu0 0.0
    %798 = vmatprep.subr.mxu0 0.0
    %799 = vmatpush1.msra.mxu0 0.0
    %800 = vmatprep.subr.mxu0 0.0
    %801 = vmatpush1.msra.mxu0 0.0
    %802 = vmatprep.subr.mxu0 0.0
    %803 = vmatpush1.msra.mxu0 0.0
    %804 = vmatprep.mubr.f32.mxu0 0.0
    %805 = vmatmul.mubr.f32.gmra.mrb[0].mxu0 %v317
    %v806 = vpop.f32.mrb[0].mxu0
    %v807 = vadd.f32 %v313, %v806
    %v808 = vpop.f32.mrb[0].mxu0
    %v809 = vadd.f32 %v313, %v808
    %810 = vdwg.mxu0
    %811 = vmatprep.subr.mxu0 0.0
    %812 = vmatpush1.msra.mxu0 %v74
    %813 = vmatprep.subr.mxu0 0.0
    %814 = vmatpush1.msra.mxu0 %v75
    %815 = vmatprep.subr.mxu0 0.0
    %816 = vmatpush1.msra.mxu0 %v76
    %817 = vmatprep.subr.mxu0 0.0
    %818 = vmatpush1.msra.mxu0 %v77
    %819 = vmatprep.subr.mxu0 0.0
    %820 = vmatpush1.msra.mxu0 %v78
    %821 = vmatprep.subr.mxu0 0.0
    %822 = vmatpush1.msra.mxu0 %v79
    %823 = vmatprep.subr.mxu0 0.0
    %824 = vmatpush1.msra.mxu0 %v80
    %825 = vmatprep.subr.mxu0 0.0
    %826 = vmatpush1.msra.mxu0 %v81
    %827 = vmatprep.subr.mxu0 0.0
    %828 = vmatpush1.msra.mxu0 %v82
    %829 = vmatprep.subr.mxu0 0.0
    %830 = vmatpush1.msra.mxu0 %v83
    %831 = vmatprep.subr.mxu0 0.0
    %832 = vmatpush1.msra.mxu0 %v84
    %833 = vmatprep.subr.mxu0 0.0
    %834 = vmatpush1.msra.mxu0 %v85
    %835 = vmatprep.subr.mxu0 0.0
    %836 = vmatpush1.msra.mxu0 %v86
    %837 = vmatprep.subr.mxu0 0.0
    %838 = vmatpush1.msra.mxu0 %v87
    %839 = vmatprep.subr.mxu0 0.0
    %840 = vmatpush1.msra.mxu0 %v88
    %841 = vmatprep.subr.mxu0 0.0
    %842 = vmatpush1.msra.mxu0 %v89
    %843 = vmatprep.subr.mxu0 0.0
    %844 = vmatpush1.msra.mxu0 %v90
    %845 = vmatprep.subr.mxu0 0.0
    %846 = vmatpush1.msra.mxu0 %v91
    %847 = vmatprep.subr.mxu0 0.0
    %848 = vmatpush1.msra.mxu0 %v92
    %849 = vmatprep.subr.mxu0 0.0
    %850 = vmatpush1.msra.mxu0 %v93
    %851 = vmatprep.subr.mxu0 0.0
    %852 = vmatpush1.msra.mxu0 %v94
    %853 = vmatprep.subr.mxu0 0.0
    %854 = vmatpush1.msra.mxu0 %v95
    %855 = vmatprep.subr.mxu0 0.0
    %856 = vmatpush1.msra.mxu0 %v96
    %857 = vmatprep.subr.mxu0 0.0
    %858 = vmatpush1.msra.mxu0 %v97
    %859 = vmatprep.subr.mxu0 0.0
    %860 = vmatpush1.msra.mxu0 %v98
    %861 = vmatprep.subr.mxu0 0.0
    %862 = vmatpush1.msra.mxu0 %v99
    %863 = vmatprep.subr.mxu0 0.0
    %864 = vmatpush1.msra.mxu0 %v100
    %865 = vmatprep.subr.mxu0 0.0
    %866 = vmatpush1.msra.mxu0 %v101
    %867 = vmatprep.subr.mxu0 0.0
    %868 = vmatpush1.msra.mxu0 %v102
    %869 = vmatprep.subr.mxu0 0.0
    %870 = vmatpush1.msra.mxu0 %v103
    %871 = vmatprep.subr.mxu0 0.0
    %872 = vmatpush1.msra.mxu0 %v104
    %873 = vmatprep.subr.mxu0 0.0
    %874 = vmatpush1.msra.mxu0 %v105
    %875 = vmatprep.mubr.f32.mxu0 %v809
    %876 = vmatmul.mubr.f32.gmra.mrb[0].mxu0 %v807
    %v877 = vpop.f32.mrb[0].mxu0
    %v878 = vadd.f32 %v394, %v877
    %v879 = vpop.f32.mrb[0].mxu0
    %880 = vdwg.mxu0
    %881 = vmax.xlane.f32.xlu0 %v878
    %v882 = vpop.xlane.xlu0 %881
    %v883 = vsub.f32 %v878, %v882
    %v884 = vmul.f32 %v883, 1.442695
    %v885 = vpow.pop %v884
    %886 = vadd.xlane.f32.xlu0 %v885
    %v887 = vpop.xlane.xlu0 %886
    %v888 = vrcp.pop %v887
    %v889 = vmul.f32 %v885, %v888
    %v890 = vmul.f32 %v889, %v479
    %s891 = scalar_lea.vmem [#allocation7], 8
    %892 = vst [vmem:[%s891] sm:$0xff] %v890
    %v893 = vsub.f32 %v479, %v890
    %v894 = vmul.f32 %v893, %v893
    %v895 = vsub.f32 0.0, %v894
    %v896 = vmul.f32 %v895, 100.0
    %v897 = vmul.f32 %v896, 1.442695
    %v898 = vpow.pop %v897
    %899 = vmatprep.subr.mxu0 %v109
    %900 = vmatpush1.msra.mxu0 %v108
    %901 = vmatprep.subr.mxu0 %v113
    %902 = vmatpush1.msra.mxu0 %v112
    %903 = vmatprep.subr.mxu0 %v117
    %904 = vmatpush1.msra.mxu0 %v116
    %905 = vmatprep.subr.mxu0 %v121
    %906 = vmatpush1.msra.mxu0 %v120
    %907 = vmatprep.subr.mxu0 %v125
    %908 = vmatpush1.msra.mxu0 %v124
    %909 = vmatprep.subr.mxu0 %v129
    %910 = vmatpush1.msra.mxu0 %v128
    %911 = vmatprep.subr.mxu0 %v133
    %912 = vmatpush1.msra.mxu0 %v132
    %913 = vmatprep.subr.mxu0 %v137
    %914 = vmatpush1.msra.mxu0 %v136
    %915 = vmatprep.subr.mxu0 %v141
    %916 = vmatpush1.msra.mxu0 %v140
    %917 = vmatprep.subr.mxu0 %v145
    %918 = vmatpush1.msra.mxu0 %v144
    %919 = vmatprep.subr.mxu0 %v149
    %920 = vmatpush1.msra.mxu0 %v148
    %921 = vmatprep.subr.mxu0 %v153
    %922 = vmatpush1.msra.mxu0 %v152
    %923 = vmatprep.subr.mxu0 %v157
    %924 = vmatpush1.msra.mxu0 %v156
    %925 = vmatprep.subr.mxu0 %v161
    %926 = vmatpush1.msra.mxu0 %v160
    %927 = vmatprep.subr.mxu0 %v165
    %928 = vmatpush1.msra.mxu0 %v164
    %929 = vmatprep.subr.mxu0 %v169
    %930 = vmatpush1.msra.mxu0 %v168
    %931 = vmatprep.subr.mxu0 0.0
    %932 = vmatpush1.msra.mxu0 0.0
    %933 = vmatprep.subr.mxu0 0.0
    %934 = vmatpush1.msra.mxu0 0.0
    %935 = vmatprep.subr.mxu0 0.0
    %936 = vmatpush1.msra.mxu0 0.0
    %937 = vmatprep.subr.mxu0 0.0
    %938 = vmatpush1.msra.mxu0 0.0
    %939 = vmatprep.subr.mxu0 0.0
    %940 = vmatpush1.msra.mxu0 0.0
    %941 = vmatprep.subr.mxu0 0.0
    %942 = vmatpush1.msra.mxu0 0.0
    %943 = vmatprep.subr.mxu0 0.0
    %944 = vmatpush1.msra.mxu0 0.0
    %945 = vmatprep.subr.mxu0 0.0
    %946 = vmatpush1.msra.mxu0 0.0
    %947 = vmatprep.subr.mxu0 0.0
    %948 = vmatpush1.msra.mxu0 0.0
    %949 = vmatprep.subr.mxu0 0.0
    %950 = vmatpush1.msra.mxu0 0.0
    %951 = vmatprep.subr.mxu0 0.0
    %952 = vmatpush1.msra.mxu0 0.0
    %953 = vmatprep.subr.mxu0 0.0
    %954 = vmatpush1.msra.mxu0 0.0
    %955 = vmatprep.subr.mxu0 0.0
    %956 = vmatpush1.msra.mxu0 0.0
    %957 = vmatprep.subr.mxu0 0.0
    %958 = vmatpush1.msra.mxu0 0.0
    %959 = vmatprep.subr.mxu0 0.0
    %960 = vmatpush1.msra.mxu0 0.0
    %961 = vmatprep.subr.mxu0 0.0
    %962 = vmatpush1.msra.mxu0 0.0
    %963 = vmatprep.mubr.f32.mxu0 0.0
    %964 = vmatmul.mubr.f32.gmra.mrb[0].mxu0 %v898
    %v965 = vpop.f32.mrb[0].mxu0
    %v966 = vadd.f32 0.0, %v965
    %v967 = vpop.f32.mrb[0].mxu0
    %v968 = vadd.f32 0.0, %v967
    %969 = vdwg.mxu0
    %970 = vmatprep.subr.mxu0 %v111
    %971 = vmatpush1.msra.mxu0 %v110
    %972 = vmatprep.subr.mxu0 %v115
    %973 = vmatpush1.msra.mxu0 %v114
    %974 = vmatprep.subr.mxu0 %v119
    %975 = vmatpush1.msra.mxu0 %v118
    %976 = vmatprep.subr.mxu0 %v123
    %977 = vmatpush1.msra.mxu0 %v122
    %978 = vmatprep.subr.mxu0 %v127
    %979 = vmatpush1.msra.mxu0 %v126
    %980 = vmatprep.subr.mxu0 %v131
    %981 = vmatpush1.msra.mxu0 %v130
    %982 = vmatprep.subr.mxu0 %v135
    %983 = vmatpush1.msra.mxu0 %v134
    %984 = vmatprep.subr.mxu0 %v139
    %985 = vmatpush1.msra.mxu0 %v138
    %986 = vmatprep.subr.mxu0 %v143
    %987 = vmatpush1.msra.mxu0 %v142
    %988 = vmatprep.subr.mxu0 %v147
    %989 = vmatpush1.msra.mxu0 %v146
    %990 = vmatprep.subr.mxu0 %v151
    %991 = vmatpush1.msra.mxu0 %v150
    %992 = vmatprep.subr.mxu0 %v155
    %993 = vmatpush1.msra.mxu0 %v154
    %994 = vmatprep.subr.mxu0 %v159
    %995 = vmatpush1.msra.mxu0 %v158
    %996 = vmatprep.subr.mxu0 %v163
    %997 = vmatpush1.msra.mxu0 %v162
    %998 = vmatprep.subr.mxu0 %v167
    %999 = vmatpush1.msra.mxu0 %v166
    %1000 = vmatprep.subr.mxu0 %v171
    %1001 = vmatpush1.msra.mxu0 %v170
    %1002 = vmatprep.subr.mxu0 0.0
    %1003 = vmatpush1.msra.mxu0 0.0
    %1004 = vmatprep.subr.mxu0 0.0
    %1005 = vmatpush1.msra.mxu0 0.0
    %1006 = vmatprep.subr.mxu0 0.0
    %1007 = vmatpush1.msra.mxu0 0.0
    %1008 = vmatprep.subr.mxu0 0.0
    %1009 = vmatpush1.msra.mxu0 0.0
    %1010 = vmatprep.subr.mxu0 0.0
    %1011 = vmatpush1.msra.mxu0 0.0
    %1012 = vmatprep.subr.mxu0 0.0
    %1013 = vmatpush1.msra.mxu0 0.0
    %1014 = vmatprep.subr.mxu0 0.0
    %1015 = vmatpush1.msra.mxu0 0.0
    %1016 = vmatprep.subr.mxu0 0.0
    %1017 = vmatpush1.msra.mxu0 0.0
    %1018 = vmatprep.subr.mxu0 0.0
    %1019 = vmatpush1.msra.mxu0 0.0
    %1020 = vmatprep.subr.mxu0 0.0
    %1021 = vmatpush1.msra.mxu0 0.0
    %1022 = vmatprep.subr.mxu0 0.0
    %1023 = vmatpush1.msra.mxu0 0.0
    %1024 = vmatprep.subr.mxu0 0.0
    %1025 = vmatpush1.msra.mxu0 0.0
    %1026 = vmatprep.subr.mxu0 0.0
    %1027 = vmatpush1.msra.mxu0 0.0
    %1028 = vmatprep.subr.mxu0 0.0
    %1029 = vmatpush1.msra.mxu0 0.0
    %1030 = vmatprep.subr.mxu0 0.0
    %1031 = vmatpush1.msra.mxu0 0.0
    %1032 = vmatprep.subr.mxu0 0.0
    %1033 = vmatpush1.msra.mxu0 0.0
    %1034 = vmatprep.mubr.f32.mxu0 0.0
    %1035 = vmatmul.mubr.f32.gmra.mrb[0].mxu0 %v898
    %v1036 = vpop.f32.mrb[0].mxu0
    %v1037 = vadd.f32 0.0, %v1036
    %v1038 = vpop.f32.mrb[0].mxu0
    %v1039 = vadd.f32 0.0, %v1038
    %1040 = vdwg.mxu0
    %v1041 = vmul.f32 %v966, %v1037
    %v1042 = vmul.f32 %v968, %v1039
    %s1043 = scalar_lea.vmem [#allocation8], 16
    %1044 = vst [vmem:[%s1043] sm:$0xff] %v1041
    %1045 = vst [vmem:[%s1043 + $0x8] sm:$0xff] %v1042
    // Predicated region
    $region46: #{tpu_custom_call.1} parent=1 // pred_check
      _
    $region47: #{tpu_custom_call.1} parent=1 // pred_check_branch
      %1047 = sbr.rel (0) target = $region49
    $region48: #{tpu_custom_call.1} parent=1 // pred_region
      %s1049 = ssub.s32 256, 256
      %1050 = vsyncadd [#allocation4], %s1049
      %s1051 = sshll.u32 [#allocation7], 4
      %s1052 = int_to_ptr.vmem [resolvable:$true] %s1051
      %1057 = dma.vmem_to_hbm [thread:$0]  %s1052, 256, %s9, [#allocation4], 128, 128, 8
    $region49: #{tpu_custom_call.1} parent=1 // pred_fallthru
      _
    // Predicated region
    $region50: #{tpu_custom_call.1} parent=1 // pred_check
      _
    $region51: #{tpu_custom_call.1} parent=1 // pred_check_branch
      %1059 = sbr.rel (0) target = $region53
    $region52: #{tpu_custom_call.1} parent=1 // pred_region
      %s1061 = ssub.s32 512, 512
      %1062 = vsyncadd [#allocation9], %s1061
      %s1063 = sshll.u32 [#allocation8], 4
      %s1064 = int_to_ptr.vmem [resolvable:$true] %s1063
      %1069 = dma.vmem_to_hbm [thread:$0]  %s1064, 512, %s10, [#allocation9], 256, 256, 16
    $region53: #{tpu_custom_call.1} parent=1 // pred_fallthru
      _
    // Predicated region
    $region54: #{tpu_custom_call.1} parent=1 // pred_check
      _
    $region55: #{tpu_custom_call.1} parent=1 // pred_check_branch
      %1071 = sbr.rel (0) target = $region57
    $region56: #{tpu_custom_call.1} parent=1 // pred_region
      %1072 = dma.done [#allocation4], 256
    $region57: #{tpu_custom_call.1} parent=1 // pred_fallthru
      _
    // Predicated region
    $region58: #{tpu_custom_call.1} parent=1 // pred_check
      _
    $region59: #{tpu_custom_call.1} parent=1 // pred_check_branch
      %1074 = sbr.rel (0) target = $region61
    $region60: #{tpu_custom_call.1} parent=1 // pred_region
      %1075 = dma.done [#allocation9], 512
    $region61: #{tpu_custom_call.1} parent=1 // pred_fallthru
      _
    %1076 = vsyncpa [#allocation3], 1
    %1077 = vsyncpa [#allocation6], 1
    %1078 = vsyncpa [#allocation4], 1
    %1079 = vsyncpa [#allocation9], 1

</llo_original>
